<compile_context>
chip_gen: v7x
topology: tpu7x:2x2x1
jax: 0.10.0
libtpu: 0.0.40
codegen_flags: <defaults>
</compile_context>

<pallas_src>
import functools

import jax
import jax.numpy as jnp
from jax import lax
from jax.experimental import pallas as pl
from jax.experimental.pallas import tpu as pltpu

BN_EPS = 1e-5
SN_EPS = 1e-12
_LANE = 128
_SUBLANE = 8


# --------------------------------------------------------------------------- #
# Sizing helpers
# --------------------------------------------------------------------------- #
def _vmem_capacity_bytes():
    """Physical VMEM of the current generation (conservative fallback: v7x 64 MiB)."""
    try:
        info = pltpu.get_tpu_info()
        cap = getattr(info, "vmem_capacity_bytes", None)
        if cap:
            return int(cap)
    except Exception:
        pass
    return 64 * 1024 * 1024


def _round_up(x, m):
    return ((x + m - 1) // m) * m


def _channel_tile(C, cap):
    """Largest c_tile dividing C that is a multiple of 8 (or == C), <= cap."""
    cap = max(1, cap)
    if C <= cap and C % _SUBLANE != 0:
        return C
    t = (min(cap, C) // _SUBLANE) * _SUBLANE
    while t >= _SUBLANE:
        if C % t == 0:
            return t
        t -= _SUBLANE
    return C  # no multiple-of-8 divisor fits the cap -> whole-C block


def _hw_tile(HW_pad, target):
    """Largest multiple of 128 dividing HW_pad that is <= target (>= 128)."""
    target = max(_LANE, (int(target) // _LANE) * _LANE)
    t = min(target, HW_pad)
    t = max(_LANE, (t // _LANE) * _LANE)
    while t > _LANE and HW_pad % t != 0:
        t -= _LANE
    if HW_pad % t != 0:
        t = _LANE
    return t


# --------------------------------------------------------------------------- #
# Kernels
# --------------------------------------------------------------------------- #
def _cbn_fused_kernel(x_ref, g_ref, b_ref, o_ref, *, inv_count):
    # x_ref/o_ref: (N, c_tile, HW_pad)   g_ref/b_ref: (N, c_tile, 1)
    x = x_ref[...].astype(jnp.float32)

    # Single traversal: per-channel sum and sum-of-squares.
    # Lane reduce -> XLU, leading-dim adds -> VALU (free slots under the HBM bound).
    s = jnp.sum(jnp.sum(x, axis=2, keepdims=True), axis=0, keepdims=True)
    sq = jnp.sum(jnp.sum(x * x, axis=2, keepdims=True), axis=0, keepdims=True)

    mean = s * inv_count                                    # (1, c_tile, 1)
    var = jnp.maximum(sq * inv_count - mean * mean, 0.0)    # biased var, clamped
    inv_std = lax.rsqrt(var + BN_EPS)                       # EUP

    scale = g_ref[...].astype(jnp.float32) * inv_std        # (N, c_tile, 1)
    shift = b_ref[...].astype(jnp.float32) - mean * scale   # (N, c_tile, 1)

    # Apply phase: 2 per-element VALU ops (mul, add).
    o_ref[...] = (x * scale + shift).astype(o_ref.dtype)


def _cbn_stats_kernel(x_ref, sum_ref, sq_ref):
    # x_ref: (N, c_tile, hw_tile)   sum_ref/sq_ref: (1, c_tile, 1) accumulators.
    @pl.when(pl.program_id(1) == 0)
    def _():
        sum_ref[...] = jnp.zeros_like(sum_ref)
        sq_ref[...] = jnp.zeros_like(sq_ref)

    x = x_ref[...].astype(jnp.float32)
    sum_ref[...] += jnp.sum(jnp.sum(x, axis=2, keepdims=True), axis=0, keepdims=True)
    sq_ref[...] += jnp.sum(jnp.sum(x * x, axis=2, keepdims=True), axis=0, keepdims=True)


def _cbn_apply_kernel(x_ref, s_ref, t_ref, o_ref):
    # x_ref/o_ref: (N, c_tile, hw_tile)   s_ref/t_ref: (N, c_tile, 1)
    o_ref[...] = (x_ref[...].astype(jnp.float32) * s_ref[...] + t_ref[...]).astype(o_ref.dtype)


# --------------------------------------------------------------------------- #
# Glue: spectral-normalized embedding lookup
# --------------------------------------------------------------------------- #
def _spectral_norm_weight(w, u):
    # One power iteration (same algorithm as torch.nn.utils.spectral_norm).
    # TODO(synk): PyTorch keeps a persistent `u` buffer updated every forward;
    # here we use a fixed deterministic `u` (semantics identical for one call).
    v = w.T @ u
    v = v / (jnp.linalg.norm(v) + SN_EPS)
    u_new = w @ v
    u_new = u_new / (jnp.linalg.norm(u_new) + SN_EPS)
    sigma = u_new @ (w @ v)
    return w / sigma


# --------------------------------------------------------------------------- #
# Wrapper
# --------------------------------------------------------------------------- #
def conditional_batch_norm_2d(x, y, embed_weight, u, num_features,
                              c_tile=None, hw_tile=None, force_two_pass=False):
    """x: (N, C, H, W) float32 (NCHW), y: (N,) int32 class ids."""
    N, C, H, W = x.shape
    assert C == num_features
    HW = H * W
    HW_pad = max(_LANE, _round_up(HW, _LANE))
    itemsize = x.dtype.itemsize

    # --- glue: spectral-normalized embedding lookup -> per-sample gamma/beta ---
    w_sn = _spectral_norm_weight(embed_weight, u)           # (num_classes, 2C)
    gb = jnp.take(w_sn, y, axis=0)                          # (N, 2C)
    gamma = gb[:, :C][:, :, None]                           # (N, C, 1)
    beta = gb[:, C:][:, :, None]                            # (N, C, 1)

    # --- lane-dense layout: contiguous reshape + zero-pad spatial to x128 ---
    x_flat = x.reshape(N, C, HW)
    if HW_pad != HW:
        x_flat = jnp.pad(x_flat, ((0, 0), (0, 0), (0, HW_pad - HW)))

    # --- generation-aware VMEM / grid sizing ---
    vmem_cap = _vmem_capacity_bytes()
    vmem_limit = int(min(48 * 1024 * 1024, (vmem_cap * 3) // 4))
    # Budget for the 2x(in+out) pipelined copies; leaves room for the f32
    # temporaries Mosaic materializes inside the fused kernel.
    block_budget = int(min(12 * 1024 * 1024, vmem_limit // 3))

    per_channel_block = 4 * N * HW_pad * itemsize            # 2 x (in + out)
    cap_from_budget = block_budget // max(per_channel_block, 1)
    two_pass = force_two_pass or cap_from_budget < 1

    # Padded zeros contribute 0 to sum / sumsq -> exclude the pad via the count.
    inv_count = 1.0 / float(N * HW)

    if not two_pass:
        # ---------------- single fused pass, tiled over channels -------------
        if c_tile is None:
            cap = cap_from_budget
            if C >= 32:
                cap = min(cap, C // 4)   # >=4 grid steps: megacore + pipelining
            elif C >= 16:
                cap = min(cap, C // 2)   # >=2 grid steps
            c_tile = _channel_tile(C, cap)
        assert C % c_tile == 0
        grid = (C // c_tile,)

        out_flat = pl.pallas_call(
            functools.partial(_cbn_fused_kernel, inv_count=inv_count),
            out_shape=jax.ShapeDtypeStruct((N, C, HW_pad), x.dtype),
            grid=grid,
            in_specs=[
                pl.BlockSpec((N, c_tile, HW_pad), lambda i: (0, i, 0)),
                pl.BlockSpec((N, c_tile, 1), lambda i: (0, i, 0)),
                pl.BlockSpec((N, c_tile, 1), lambda i: (0, i, 0)),
            ],
            out_specs=pl.BlockSpec((N, c_tile, HW_pad), lambda i: (0, i, 0)),
            compiler_params=pltpu.CompilerParams(
                dimension_semantics=("parallel",),
                vmem_limit_bytes=vmem_limit,
            ),
            cost_estimate=pl.CostEstimate(
                flops=int(5 * N * C * HW_pad),
                transcendentals=int(N * C),
                bytes_accessed=int(2 * N * C * HW_pad * itemsize),
            ),
        )(x_flat, gamma, beta)
    else:
        # ------- two passes: stats reduction over HW tiles, then apply -------
        # (sum/sumsq accumulated across ALL HW tiles before normalizing, so the
        #  statistics remain true per-channel batch statistics.)
        cap = max(1, block_budget // max(4 * N * _LANE * itemsize, 1))
        if C >= 32:
            cap = min(cap, C // 4)
        elif C >= 16:
            cap = min(cap, C // 2)
        if c_tile is None:
            c_tile = _channel_tile(C, cap)
        assert C % c_tile == 0
        if hw_tile is None:
            hw_tile = _hw_tile(HW_pad, block_budget // max(4 * N * c_tile * itemsize, 1))
        assert HW_pad % hw_tile == 0
        grid2 = (C // c_tile, HW_pad // hw_tile)

        sums, sqs = pl.pallas_call(
            _cbn_stats_kernel,
            out_shape=(jax.ShapeDtypeStruct((1, C, 1), jnp.float32),
                       jax.ShapeDtypeStruct((1, C, 1), jnp.float32)),
            grid=grid2,
            in_specs=[pl.BlockSpec((N, c_tile, hw_tile), lambda i, j: (0, i, j))],
            out_specs=(pl.BlockSpec((1, c_tile, 1), lambda i, j: (0, i, 0)),
                       pl.BlockSpec((1, c_tile, 1), lambda i, j: (0, i, 0))),
            compiler_params=pltpu.CompilerParams(
                dimension_semantics=("parallel", "arbitrary"),
                vmem_limit_bytes=vmem_limit,
            ),
            cost_estimate=pl.CostEstimate(
                flops=int(3 * N * C * HW_pad),
                transcendentals=0,
                bytes_accessed=int(N * C * HW_pad * itemsize),
            ),
        )(x_flat)

        # Tiny per-channel finalize in plain JAX (f32, var clamped at 0).
        mean = sums * inv_count                               # (1, C, 1)
        var = jnp.maximum(sqs * inv_count - mean * mean, 0.0)
        inv_std = lax.rsqrt(var + BN_EPS)
        scale = gamma * inv_std                               # (N, C, 1)
        shift = beta - mean * scale                           # (N, C, 1)

        out_flat = pl.pallas_call(
            _cbn_apply_kernel,
            out_shape=jax.ShapeDtypeStruct((N, C, HW_pad), x.dtype),
            grid=grid2,
            in_specs=[
                pl.BlockSpec((N, c_tile, hw_tile), lambda i, j: (0, i, j)),
                pl.BlockSpec((N, c_tile, 1), lambda i, j: (0, i, 0)),
                pl.BlockSpec((N, c_tile, 1), lambda i, j: (0, i, 0)),
            ],
            out_specs=pl.BlockSpec((N, c_tile, hw_tile), lambda i, j: (0, i, j)),
            compiler_params=pltpu.CompilerParams(
                dimension_semantics=("parallel", "parallel"),
                vmem_limit_bytes=vmem_limit,
            ),
            cost_estimate=pl.CostEstimate(
                flops=int(2 * N * C * HW_pad),
                transcendentals=0,
                bytes_accessed=int(2 * N * C * HW_pad * itemsize),
            ),
        )(x_flat, scale, shift)

    if HW_pad != HW:
        out_flat = out_flat[:, :, :HW]
    return out_flat.reshape(N, C, H, W)


# --------------------------------------------------------------------------- #
# Pure-JAX reference + test harness
# --------------------------------------------------------------------------- #
def _reference(x, y, embed_weight, u, num_features):
    w_sn = _spectral_norm_weight(embed_weight, u)
    gb = jnp.take(w_sn, y, axis=0)
    gamma = gb[:, :num_features][:, :, None, None]
    beta = gb[:, num_features:][:, :, None, None]
    mean = jnp.mean(x, axis=(0, 2, 3), keepdims=True)
    var = jnp.mean((x - mean) ** 2, axis=(0, 2, 3), keepdims=True)
    xhat = (x - mean) / jnp.sqrt(var + BN_EPS)
    return gamma * xhat + beta


def _make_inputs(key, N, C, H, W, num_classes):
    k_x, k_y, k_w, k_u = jax.random.split(key, 4)
    x = jax.random.normal(k_x, (N, C, H, W), dtype=jnp.float32)
    y = jax.random.randint(k_y, (N,), 0, num_classes, dtype=jnp.int32)
    # Embedding weight init per module.__init__:
    #   weight[:, :C] ~ Normal(1, 0.02),  weight[:, C:] = 0
    w_gamma = 1.0 + 0.02 * jax.random.normal(k_w, (num_classes, C), dtype=jnp.float32)
    w_beta = jnp.zeros((num_classes, C), dtype=jnp.float32)
    embed_weight = jnp.concatenate([w_gamma, w_beta], axis=1)      # (num_classes, 2C)
    # Deterministic power-iteration vector (stands in for torch's persistent u).
    u = jax.random.normal(k_u, (num_classes,), dtype=jnp.float32)
    u = u / (jnp.linalg.norm(u) + SN_EPS)
    return x, y, embed_weight, u


if __name__ == "__main__":
    key = jax.random.PRNGKey(0)
    k0, k1, k2, k3 = jax.random.split(key, 4)
    num_classes = 5

    def _check(out, ref, name):
        assert out.shape == ref.shape, name
        assert jnp.allclose(out, ref, atol=2e-5, rtol=2e-5), f"mismatch vs reference ({name})"

    # Case 1: module-sized small shape (single fused pass, c_tile == C).
    N, C, H, W = 2, 4, 16, 16
    x, y, ew, u = _make_inputs(k0, N, C, H, W, num_classes)
    out = jax.block_until_ready(conditional_batch_norm_2d(x, y, ew, u, C))
    _check(out, _reference(x, y, ew, u, C), "case 1")

    # Case 2: channel-tiled grid with >= 2 steps (C=16 -> c_tile=8, grid=(2,)).
    N2, C2, H2, W2 = 2, 16, 16, 16
    x2, y2, ew2, u2 = _make_inputs(k1, N2, C2, H2, W2, num_classes)
    out2 = jax.block_until_ready(conditional_batch_norm_2d(x2, y2, ew2, u2, C2))
    _check(out2, _reference(x2, y2, ew2, u2, C2), "case 2")

    # Case 3: non-multiple-of-128 spatial (7x7=49 -> padded lane-dense slab).
    N3, C3, H3, W3 = 2, 8, 7, 7
    x3, y3, ew3, u3 = _make_inputs(k2, N3, C3, H3, W3, num_classes)
    out3 = jax.block_until_ready(conditional_batch_norm_2d(x3, y3, ew3, u3, C3))
    _check(out3, _reference(x3, y3, ew3, u3, C3), "case 3")

    # Case 4: exercise the two-pass scheme (stats accumulation across HW tiles).
    N4, C4, H4, W4 = 2, 16, 16, 16
    x4, y4, ew4, u4 = _make_inputs(k3, N4, C4, H4, W4, num_classes)
    out4 = jax.block_until_ready(
        conditional_batch_norm_2d(x4, y4, ew4, u4, C4,
                                  force_two_pass=True, hw_tile=128))
    _check(out4, _reference(x4, y4, ew4, u4, C4), "case 4")

    print("KERNEL_OK")
</pallas_src>

<mosaic_0001>
module attributes {stable_mosaic.version = 11 : i64} {
  func.func @_cbn_fused_kernel(%arg0: i32, %arg1: memref<2x4x256xf32, #tpu.memory_space<vmem>>, %arg2: memref<2x4x1xf32, #tpu.memory_space<vmem>>, %arg3: memref<2x4x1xf32, #tpu.memory_space<vmem>>, %arg4: memref<2x4x256xf32, #tpu.memory_space<vmem>>) attributes {dimension_semantics = [#tpu.dimension_semantics<parallel>], iteration_bounds = array<i64: 1>, scalar_prefetch = 0 : i64, scratch_operands = 0 : i64, tpu.core_type = #tpu.core_type<tc>, window_params = [{transform_indices = @transform_0, window_bounds = array<i64: 2, 4, 256>}, {transform_indices = @transform_1, window_bounds = array<i64: 2, 4, 1>}, {transform_indices = @transform_2, window_bounds = array<i64: 2, 4, 1>}, {transform_indices = @transform_3, window_bounds = array<i64: 2, 4, 256>}]} {
    %c0 = arith.constant 0 : index
    %c0_0 = arith.constant 0 : index
    %c0_1 = arith.constant 0 : index
    %0 = vector.load %arg1[%c0, %c0_0, %c0_1] : memref<2x4x256xf32, #tpu.memory_space<vmem>>, vector<2x4x256xf32>
    %cst = arith.constant dense<0.000000e+00> : vector<2x4xf32>
    %1 = vector.multi_reduction <add>, %0, %cst [2] : vector<2x4x256xf32> to vector<2x4xf32>
    %2 = vector.shape_cast %1 : vector<2x4xf32> to vector<2x4x1xf32>
    %cst_2 = arith.constant dense<0.000000e+00> : vector<4x1xf32>
    %3 = vector.multi_reduction <add>, %2, %cst_2 [0] : vector<2x4x1xf32> to vector<4x1xf32>
    %4 = vector.shape_cast %3 : vector<4x1xf32> to vector<1x4x1xf32>
    %5 = arith.mulf %0, %0 : vector<2x4x256xf32>
    %cst_3 = arith.constant dense<0.000000e+00> : vector<2x4xf32>
    %6 = vector.multi_reduction <add>, %5, %cst_3 [2] : vector<2x4x256xf32> to vector<2x4xf32>
    %7 = vector.shape_cast %6 : vector<2x4xf32> to vector<2x4x1xf32>
    %cst_4 = arith.constant dense<0.000000e+00> : vector<4x1xf32>
    %8 = vector.multi_reduction <add>, %7, %cst_4 [0] : vector<2x4x1xf32> to vector<4x1xf32>
    %9 = vector.shape_cast %8 : vector<4x1xf32> to vector<1x4x1xf32>
    %cst_5 = arith.constant 0.001953125 : f32
    %10 = vector.broadcast %cst_5 : f32 to vector<1x4x1xf32>
    %11 = arith.mulf %4, %10 : vector<1x4x1xf32>
    %cst_6 = arith.constant 0.001953125 : f32
    %12 = vector.broadcast %cst_6 : f32 to vector<1x4x1xf32>
    %13 = arith.mulf %9, %12 : vector<1x4x1xf32>
    %14 = arith.mulf %11, %11 : vector<1x4x1xf32>
    %15 = arith.subf %13, %14 : vector<1x4x1xf32>
    %cst_7 = arith.constant 0.000000e+00 : f32
    %16 = vector.broadcast %cst_7 : f32 to vector<1x4x1xf32>
    %17 = arith.maximumf %15, %16 : vector<1x4x1xf32>
    %cst_8 = arith.constant 9.99999974E-6 : f32
    %18 = vector.broadcast %cst_8 : f32 to vector<1x4x1xf32>
    %19 = arith.addf %17, %18 : vector<1x4x1xf32>
    %20 = math.rsqrt %19 : vector<1x4x1xf32>
    %c0_9 = arith.constant 0 : index
    %c0_10 = arith.constant 0 : index
    %c0_11 = arith.constant 0 : index
    %21 = vector.load %arg2[%c0_9, %c0_10, %c0_11] : memref<2x4x1xf32, #tpu.memory_space<vmem>>, vector<2x4x1xf32>
    %22 = vector.broadcast %20 : vector<1x4x1xf32> to vector<2x4x1xf32>
    %23 = arith.mulf %21, %22 : vector<2x4x1xf32>
    %c0_12 = arith.constant 0 : index
    %c0_13 = arith.constant 0 : index
    %c0_14 = arith.constant 0 : index
    %24 = vector.load %arg3[%c0_12, %c0_13, %c0_14] : memref<2x4x1xf32, #tpu.memory_space<vmem>>, vector<2x4x1xf32>
    %25 = vector.broadcast %11 : vector<1x4x1xf32> to vector<2x4x1xf32>
    %26 = arith.mulf %25, %23 : vector<2x4x1xf32>
    %27 = arith.subf %24, %26 : vector<2x4x1xf32>
    %28 = vector.broadcast %23 : vector<2x4x1xf32> to vector<2x4x256xf32>
    %29 = arith.mulf %0, %28 : vector<2x4x256xf32>
    %30 = vector.broadcast %27 : vector<2x4x1xf32> to vector<2x4x256xf32>
    %31 = arith.addf %29, %30 : vector<2x4x256xf32>
    %c0_15 = arith.constant 0 : index
    %c0_16 = arith.constant 0 : index
    %c0_17 = arith.constant 0 : index
    %32 = vector.load %arg4[%c0_15, %c0_16, %c0_17] : memref<2x4x256xf32, #tpu.memory_space<vmem>>, vector<2x4x256xf32>
    tpu.vector_store %arg4[%c0_15, %c0_16, %c0_17], %31 {strides = array<i32>} : memref<2x4x256xf32, #tpu.memory_space<vmem>>, vector<2x4x256xf32>,
    return
  }
  func.func @transform_0(%arg0: i32) -> (i32, i32, i32) {
    %c0_i32 = arith.constant 0 : i32
    %c0_i32_0 = arith.constant 0 : i32
    %c0_i32_1 = arith.constant 0 : i32
    return %c0_i32, %arg0, %c0_i32_0 : i32, i32, i32
  }
  func.func @transform_1(%arg0: i32) -> (i32, i32, i32) {
    %c0_i32 = arith.constant 0 : i32
    %c0_i32_0 = arith.constant 0 : i32
    %c0_i32_1 = arith.constant 0 : i32
    return %c0_i32, %arg0, %c0_i32_0 : i32, i32, i32
  }
  func.func @transform_2(%arg0: i32) -> (i32, i32, i32) {
    %c0_i32 = arith.constant 0 : i32
    %c0_i32_0 = arith.constant 0 : i32
    %c0_i32_1 = arith.constant 0 : i32
    return %c0_i32, %arg0, %c0_i32_0 : i32, i32, i32
  }
  func.func @transform_3(%arg0: i32) -> (i32, i32, i32) {
    %c0_i32 = arith.constant 0 : i32
    %c0_i32_0 = arith.constant 0 : i32
    %c0_i32_1 = arith.constant 0 : i32
    return %c0_i32, %arg0, %c0_i32_0 : i32, i32, i32
  }
}

</mosaic_0001>

<llo_original>
// kernel: tpu_custom_call.1
$region0: #{tpu_custom_call.1}
  #allocation0 [shape = 'u32[]', space=smem, size = 0x4, offset = 0x4, fixed_abs, tag = 'smem constant byte address 0x4 - core index']
  #allocation1 [shape = 'u32[144,128]{1,0:T(1,128)}', space=vmem, size = 0x12000, scoped, tag = 'internal scratch']
  %s0 = inlined_call_operand.vmem [shape: f32[2,4,256], index: 0, kind: input, shape index: {}]
  %s1 = inlined_call_operand.vmem [shape: f32[2,4,1], index: 1, kind: input, shape index: {}]
  %s2 = inlined_call_operand.vmem [shape: f32[2,4,1], index: 2, kind: input, shape index: {}]
  %s3 = inlined_call_operand.hbm [shape: f32[2,4,256], index: 3, kind: output, shape index: {}]
  %s4 = sld [smem:[#allocation0]]
  $region22: #{tpu_custom_call.1} parent=0
    _
  %s6 = ssub.s32 1, %s4
  %s7 = scalar_select 0, %s6, %s4
  $region1: #{tpu_custom_call.1} parent=0
    #allocation2 [shape = 'u8[8192]{0}', space=vmem, size = 0x2000, scoped, tag = 'output window, operand 0, single buffered']
    #allocation3 [shape = 's32[1]{0}', space=sflag, size = 0x4, scoped, tag = 'scoped memory for tpu_custom_call.1']
    %8 = vsyncpa [#allocation3], 0
    // Predicated region
    $region2: #{tpu_custom_call.1} parent=1 // pred_check
      _
    $region3: #{tpu_custom_call.1} parent=1 // pred_check_branch
      %10 = sbr.rel (0) target = $region5
    $region4: #{tpu_custom_call.1} parent=1 // pred_region
      _
    $region5: #{tpu_custom_call.1} parent=1 // pred_fallthru
      _
    // Predicated region
    $region6: #{tpu_custom_call.1} parent=1 // pred_check
      _
    $region7: #{tpu_custom_call.1} parent=1 // pred_check_branch
      %12 = sbr.rel (0) target = $region9
    $region8: #{tpu_custom_call.1} parent=1 // pred_region
      _
    $region9: #{tpu_custom_call.1} parent=1 // pred_fallthru
      _
    // Predicated region
    $region10: #{tpu_custom_call.1} parent=1 // pred_check
      _
    $region11: #{tpu_custom_call.1} parent=1 // pred_check_branch
      %14 = sbr.rel (0) target = $region13
    $region12: #{tpu_custom_call.1} parent=1 // pred_region
      _
    $region13: #{tpu_custom_call.1} parent=1 // pred_fallthru
      _
    %v15 = vld [vmem:[%s0] sm:$0xff]
    %v16 = vld [vmem:[%s0 + $0x8] sm:$0xff]
    %v19 = vcombine.high %v15, %v15
    %v20 = vcombine.high %v16, %v16
    %vm23 = vcmask 1043456
    %v24 = vsel %vm23, %v15, 0.0
    %v25 = vsel %vm23, %v19, 0.0
    %v26 = vadd.f32 %v24, %v25
    %27 = vadd.xlane.f32.xlu0 %v26
    %v28 = vpop.xlane.xlu0 %27
    %v29 = vsel %vm23, %v16, 0.0
    %v30 = vsel %vm23, %v20, 0.0
    %v31 = vadd.f32 %v29, %v30
    %32 = vadd.xlane.f32.xlu0 %v31
    %v33 = vpop.xlane.xlu0 %32
    %v34 = vsel %vm23, %v28, 0.0
    %v35 = vsel %vm23, %v33, 0.0
    %v36 = vadd.f32 %v34, %v35
    %v37 = vmul.f32 %v15, %v15
    %v38 = vmul.f32 %v16, %v16
    %v41 = vcombine.high %v37, %v37
    %v42 = vcombine.high %v38, %v38
    %v45 = vsel %vm23, %v37, 0.0
    %v46 = vsel %vm23, %v41, 0.0
    %v47 = vadd.f32 %v45, %v46
    %48 = vadd.xlane.f32.xlu0 %v47
    %v49 = vpop.xlane.xlu0 %48
    %v50 = vsel %vm23, %v38, 0.0
    %v51 = vsel %vm23, %v42, 0.0
    %v52 = vadd.f32 %v50, %v51
    %53 = vadd.xlane.f32.xlu0 %v52
    %v54 = vpop.xlane.xlu0 %53
    %v55 = vsel %vm23, %v49, 0.0
    %v56 = vsel %vm23, %v54, 0.0
    %v57 = vadd.f32 %v55, %v56
    %v58 = vmul.f32 %v36, 0.001953125
    %v59 = vmul.f32 %v57, 0.001953125
    %v60 = vmul.f32 %v58, %v58
    %v61 = vsub.f32 %v59, %v60
    %v62 = vmax.f32 %v61, 0.0
    %v63 = vadd.f32 %v62, 1e-05
    %v64 = vrsqrt.pop %v63
    %v65 = vld [vmem:[%s1] sm:$0xf]
    %v66 = vld [vmem:[%s1 + $0x4] sm:$0xf]
    %v67 = vmul.f32 %v65, %v64
    %v68 = vmul.f32 %v66, %v64
    %v69 = vld [vmem:[%s2] sm:$0xf]
    %v70 = vld [vmem:[%s2 + $0x4] sm:$0xf]
    %v71 = vmul.f32 %v58, %v67
    %v72 = vmul.f32 %v58, %v68
    %v73 = vsub.f32 %v69, %v71
    %v74 = vsub.f32 %v70, %v72
    %76 = vset.pattern.permute.xlu0 0
    %77 = vperm.xlu0 %76, %v67
    %v78 = vpop.permute.xlu0 %77
    %80 = vset.pattern.permute.xlu0 0
    %81 = vperm.xlu0 %80, %v68
    %v82 = vpop.permute.xlu0 %81
    %v84 = vunpack.c.l.s4 839922192
    %v85 = vunpack.c.0.s8 %v84
    %v86 = vlaneseq
    %v87 = vshrl.u32 %v86, 7
    %v88 = vsub.s32 %v85, %v87
    %v89 = vrot.slane %v78, %v88
    %v91 = vunpack.c.l.s4 839922192
    %v92 = vunpack.c.0.s8 %v91
    %v93 = vlaneseq
    %v94 = vshrl.u32 %v93, 7
    %v95 = vsub.s32 %v92, %v94
    %v96 = vrot.slane %v82, %v95
    %v99 = vmul.f32 %v15, %v89
    %v100 = vmul.f32 %v16, %v96
    %102 = vset.pattern.permute.xlu0 0
    %103 = vperm.xlu0 %102, %v73
    %v104 = vpop.permute.xlu0 %103
    %106 = vset.pattern.permute.xlu0 0
    %107 = vperm.xlu0 %106, %v74
    %v108 = vpop.permute.xlu0 %107
    %v110 = vunpack.c.l.s4 839922192
    %v111 = vunpack.c.0.s8 %v110
    %v112 = vlaneseq
    %v113 = vshrl.u32 %v112, 7
    %v114 = vsub.s32 %v111, %v113
    %v115 = vrot.slane %v104, %v114
    %v117 = vunpack.c.l.s4 839922192
    %v118 = vunpack.c.0.s8 %v117
    %v119 = vlaneseq
    %v120 = vshrl.u32 %v119, 7
    %v121 = vsub.s32 %v118, %v120
    %v122 = vrot.slane %v108, %v121
    %v125 = vadd.f32 %v99, %v115
    %v126 = vadd.f32 %v100, %v122
    %127 = vst [vmem:[#allocation2] sm:$0xff] %v125
    %128 = vst [vmem:[#allocation2 + $0x8] sm:$0xff] %v126
    // Predicated region
    $region14: #{tpu_custom_call.1} parent=1 // pred_check
      _
    $region15: #{tpu_custom_call.1} parent=1 // pred_check_branch
      %130 = sbr.rel (0) target = $region17
    $region16: #{tpu_custom_call.1} parent=1 // pred_region
      %s132 = ssub.s32 256, 256
      %133 = vsyncadd [#allocation3], %s132
      %s134 = sshll.u32 [#allocation2], 4
      %s135 = int_to_ptr.vmem [resolvable:$true] %s134
      %140 = dma.vmem_to_hbm [thread:$0]  %s135, 256, %s3, [#allocation3], 128, 128, 8
    $region17: #{tpu_custom_call.1} parent=1 // pred_fallthru
      _
    // Predicated region
    $region18: #{tpu_custom_call.1} parent=1 // pred_check
      _
    $region19: #{tpu_custom_call.1} parent=1 // pred_check_branch
      %142 = sbr.rel (0) target = $region21
    $region20: #{tpu_custom_call.1} parent=1 // pred_region
      %143 = dma.done [#allocation3], 256
    $region21: #{tpu_custom_call.1} parent=1 // pred_fallthru
      _
    %144 = vsyncpa [#allocation3], 1

</llo_original>
